<compile_context>
chip_gen: v7x
topology: tpu7x:2x2x1
jax: 0.10.0
libtpu: 0.0.40
codegen_flags: <defaults>
</compile_context>

<pallas_src>
import jax
import jax.numpy as jnp
from jax.experimental import pallas as pl
from jax.experimental.pallas import tpu as pltpu


# --------------------------- VMEM budgeting -------------------------------- #
def _vmem_capacity_bytes():
    """Per-TensorCore VMEM; conservative fallback if the query is unavailable."""
    try:
        return int(pltpu.get_tpu_info().vmem_capacity_bytes)
    except Exception:
        return 64 * 1024 * 1024          # v7x per-core VMEM (smallest current part)


def _legal_batch_blocks(B):
    # Output / inv_len blocks are (bt, ...): bt must be a multiple of 8 or == B.
    return [d for d in range(B, 0, -1) if B % d == 0 and (d == B or d % 8 == 0)]


def _legal_seq_blocks(S):
    # St is a sublane dim in the hidden/bias blocks and a lane dim in the
    # lane-dense mean mask block: a multiple of 128 (or full S) satisfies both.
    return [d for d in range(S, 0, -1) if S % d == 0 and (d == S or d % 128 == 0)]


def _block_bytes(bt, st, H, itemsize):
    hidden = 2 * bt * st * H * itemsize            # double-buffered hidden block
    aux = 2 * bt * max(st, 128) * 4                # mask / bias / inv_len blocks (lane-padded)
    outb = bt * H * 4 + 2 * bt * H * itemsize      # f32 accumulator + output double-buffer
    return hidden + aux + outb


def _choose_blocks(B, S, H, itemsize, budget):
    """(bt, St): prefer >=2 batch blocks (both v7x TensorCores get work), then
    the largest streamed block, then the widest batch block (dense stores)."""
    bts, sts = _legal_batch_blocks(B), _legal_seq_blocks(S)
    fitting = [(bt, st) for bt in bts for st in sts
               if _block_bytes(bt, st, H, itemsize) <= budget]
    if not fitting:
        return bts[-1], sts[-1]          # smallest legal blocks; vmem_limit still bounds usage
    return max(fitting, key=lambda c: (B // c[0] >= 2, c[0] * c[1], c[0]))


def _choose_cls_batch_block(B, s0, H, itemsize, budget):
    bts = _legal_batch_blocks(B)
    fitting = [bt for bt in bts if _block_bytes(bt, s0, H, itemsize) <= budget]
    if not fitting:
        return bts[-1]
    return max(fitting, key=lambda bt: (B // bt >= 2, bt))


# ------------------------------- kernels ----------------------------------- #
def _cls_pool_kernel(hidden_ref, out_ref):
    # hidden block: (bt, s0, H) -- only the first packed sublane tile of the
    # sequence is DMA'd; direct ref indexing pulls just row 0 into vregs.
    out_ref[...] = hidden_ref[:, 0, :]


def _mean_pool_kernel(mask_ref, inv_len_ref, hidden_ref, out_ref, acc_ref):
    # mask_ref:    (bt, 1, St) lane-dense 0/1 in the hidden dtype
    # inv_len_ref: (bt, 1)     f32, precomputed 1 / clamp(sum(mask), 1e-9)
    # hidden_ref:  (bt, St, H)
    # acc_ref:     (bt, H)     f32 running masked sum across the S grid axis
    s = pl.program_id(1)

    @pl.when(s == 0)
    def _():
        acc_ref[...] = jnp.zeros(acc_ref.shape, acc_ref.dtype)

    # Masked partial sum over St = batched (1,St)x(St,H) matmul on the MXU,
    # accumulated in f32 regardless of the input dtype.
    acc_ref[...] += jnp.einsum(
        "bis,bsh->bih", mask_ref[...], hidden_ref[...],
        preferred_element_type=jnp.float32)[:, 0, :]

    @pl.when(s == pl.num_programs(1) - 1)
    def _():
        out_ref[...] = (acc_ref[...] * inv_len_ref[...]).astype(out_ref.dtype)


def _max_pool_kernel(bias_ref, hidden_ref, out_ref, acc_ref):
    # bias_ref:   (bt, St, 1) additive mask bias (0 valid / sentinel padded) in
    #             the hidden dtype -> one VPU add per vreg, no compare/select
    #             and no in-kernel mask transpose (XLU stays idle).
    # hidden_ref: (bt, St, H)
    # acc_ref:    (bt, H) f32 running max across the S grid axis
    s = pl.program_id(1)

    @pl.when(s == 0)
    def _():
        acc_ref[...] = jnp.full(acc_ref.shape, -jnp.inf, acc_ref.dtype)

    masked = hidden_ref[...] + bias_ref[...]               # (bt, St, H), native dtype
    acc_ref[...] = jnp.maximum(acc_ref[...],
                               jnp.max(masked, axis=1).astype(jnp.float32))

    @pl.when(s == pl.num_programs(1) - 1)
    def _():
        out_ref[...] = acc_ref[...].astype(out_ref.dtype)


# ------------------------------- wrapper ------------------------------------ #
def _pool(pooler_type, attention_mask, last_hidden_state):
    B, S, H = last_hidden_state.shape
    dtype = last_hidden_state.dtype
    itemsize = jnp.dtype(dtype).itemsize

    vmem_cap = _vmem_capacity_bytes()
    budget = int(vmem_cap * 0.45)        # double-buffered blocks target ~45% of VMEM
    out_shape = jax.ShapeDtypeStruct((B, H), dtype)

    if pooler_type == "cls":
        # One packed sublane tile: 8 / 16 / 32 rows for 4 / 2 / 1-byte dtypes.
        s0 = min(S, max(8, 32 // itemsize))
        bt = _choose_cls_batch_block(B, s0, H, itemsize, budget)
        vmem_limit = min(vmem_cap,
                         max(int(vmem_cap * 0.75),
                             _block_bytes(bt, s0, H, itemsize) + 4 * 1024 * 1024))
        return pl.pallas_call(
            _cls_pool_kernel,
            out_shape=out_shape,
            grid=(B // bt,),
            in_specs=[pl.BlockSpec((bt, s0, H), lambda b: (b, 0, 0))],
            out_specs=pl.BlockSpec((bt, H), lambda b: (b, 0)),
            compiler_params=pltpu.CompilerParams(
                dimension_semantics=("parallel",),
                vmem_limit_bytes=vmem_limit),
        )(last_hidden_state)

    bt, st = _choose_blocks(B, S, H, itemsize, budget)
    grid = (B // bt, S // st)
    vmem_limit = min(vmem_cap,
                     max(int(vmem_cap * 0.75),
                         _block_bytes(bt, st, H, itemsize) + 4 * 1024 * 1024))
    compiler_params = pltpu.CompilerParams(
        dimension_semantics=("parallel", "arbitrary"),   # batch blocks shard across TCs
        vmem_limit_bytes=vmem_limit)
    out_spec = pl.BlockSpec((bt, H), lambda b, s: (b, 0))        # resident across S axis
    hidden_spec = pl.BlockSpec((bt, st, H), lambda b, s: (b, s, 0))
    scratch = [pltpu.VMEM((bt, H), jnp.float32)]                 # running sum / max

    if pooler_type == "mean":
        mask = attention_mask.astype(dtype).reshape(B, 1, S)     # lane-dense, 0/1 exact
        inv_len = 1.0 / jnp.maximum(
            jnp.sum(attention_mask.astype(jnp.float32), axis=1, keepdims=True),
            1e-9)                                                # (B, 1) f32
        return pl.pallas_call(
            _mean_pool_kernel,
            out_shape=out_shape,
            grid=grid,
            in_specs=[
                pl.BlockSpec((bt, 1, st), lambda b, s: (b, 0, s)),
                pl.BlockSpec((bt, 1), lambda b, s: (b, 0)),
                hidden_spec,
            ],
            out_specs=out_spec,
            scratch_shapes=scratch,
            compiler_params=compiler_params,
        )(mask, inv_len, last_hidden_state)

    # max: additive bias, 0 where valid, sentinel where padded (matches the
    # PyTorch -1e9 fill; clamped for dtypes that can't represent -1e9).
    sentinel = -1.0e9
    if jnp.issubdtype(dtype, jnp.floating):
        sentinel = max(sentinel, float(jnp.finfo(dtype).min))
    bias = ((attention_mask.astype(jnp.float32) - 1.0) * (-sentinel))
    bias = bias.astype(dtype).reshape(B, S, 1)
    return pl.pallas_call(
        _max_pool_kernel,
        out_shape=out_shape,
        grid=grid,
        in_specs=[
            pl.BlockSpec((bt, st, 1), lambda b, s: (b, s, 0)),
            hidden_spec,
        ],
        out_specs=out_spec,
        scratch_shapes=scratch,
        compiler_params=compiler_params,
    )(bias, last_hidden_state)


def pooler(pooler_type, attention_mask, last_hidden_state, pooler_output=None):
    """JAX/Pallas equivalent of Pooler.forward.

    attention_mask:    [B, S]  (0/1)
    last_hidden_state: [B, S, H]
    pooler_output:     [B, H]  (only used for pooler_type == 'pooler_output')
    """
    assert pooler_type in ("pooler_output", "cls", "mean", "max")
    if pooler_type == "pooler_output":
        return pooler_output     # pure passthrough of an existing tensor
    return _pool(pooler_type, attention_mask, last_hidden_state)


# ----------------------------- references --------------------------------- #
def _ref_mean(attention_mask, h):
    m = attention_mask[..., None].astype(jnp.float32)
    return jnp.sum(h * m, axis=1) / jnp.maximum(jnp.sum(m, axis=1), 1e-9)


def _ref_max(attention_mask, h):
    m = attention_mask[..., None].astype(jnp.float32)
    return jnp.max(jnp.where(m == 0.0, jnp.float32(-1e9), h), axis=1)


def _ref_cls(attention_mask, h):
    return h[:, 0, :]


# ------------------------------- main -------------------------------------- #
if __name__ == "__main__":
    B, S, H = 2, 8, 32
    key = jax.random.PRNGKey(0)
    k_h, k_p = jax.random.split(key)

    last_hidden_state = jax.random.normal(k_h, (B, S, H), dtype=jnp.float32)
    pooler_output = jax.random.normal(k_p, (B, H), dtype=jnp.float32)
    # Deterministic variable-length attention mask: lengths 5 and 8.
    lengths = jnp.array([5, 8], dtype=jnp.int32)
    attention_mask = (jnp.arange(S)[None, :] < lengths[:, None]).astype(jnp.int32)

    refs = {"cls": _ref_cls, "mean": _ref_mean, "max": _ref_max}

    for ptype in ("pooler_output", "cls", "mean", "max"):
        out = pooler(ptype, attention_mask, last_hidden_state, pooler_output)
        out = jax.block_until_ready(out)
        if ptype == "pooler_output":
            expected = pooler_output
        else:
            expected = refs[ptype](attention_mask, last_hidden_state)
        assert out.shape == (B, H), (ptype, out.shape)
        assert jnp.allclose(out, expected, atol=1e-5, rtol=1e-5), ptype

    print("KERNEL_OK")
</pallas_src>

<mosaic_0001>
module attributes {stable_mosaic.version = 11 : i64} {
  func.func @_cls_pool_kernel(%arg0: i32, %arg1: memref<2x8x32xf32, #tpu.memory_space<vmem>>, %arg2: memref<2x32xf32, #tpu.memory_space<vmem>>) attributes {dimension_semantics = [#tpu.dimension_semantics<parallel>], iteration_bounds = array<i64: 1>, scalar_prefetch = 0 : i64, scratch_operands = 0 : i64, tpu.core_type = #tpu.core_type<tc>, window_params = [{transform_indices = @transform_0, window_bounds = array<i64: 2, 8, 32>}, {transform_indices = @transform_1, window_bounds = array<i64: 2, 32>}]} {
    %c0 = arith.constant 0 : index
    %c0_0 = arith.constant 0 : index
    %c0_1 = arith.constant 0 : index
    %0 = vector.load %arg1[%c0, %c0_0, %c0_1] : memref<2x8x32xf32, #tpu.memory_space<vmem>>, vector<2x1x32xf32>
    %1 = vector.shape_cast %0 : vector<2x1x32xf32> to vector<2x32xf32>
    %c0_2 = arith.constant 0 : index
    %c0_3 = arith.constant 0 : index
    %2 = vector.load %arg2[%c0_2, %c0_3] : memref<2x32xf32, #tpu.memory_space<vmem>>, vector<2x32xf32>
    tpu.vector_store %arg2[%c0_2, %c0_3], %1 {strides = array<i32>} : memref<2x32xf32, #tpu.memory_space<vmem>>, vector<2x32xf32>,
    return
  }
  func.func @transform_0(%arg0: i32) -> (i32, i32, i32) {
    %c0_i32 = arith.constant 0 : i32
    %c0_i32_0 = arith.constant 0 : i32
    %c0_i32_1 = arith.constant 0 : i32
    return %arg0, %c0_i32, %c0_i32_0 : i32, i32, i32
  }
  func.func @transform_1(%arg0: i32) -> (i32, i32) {
    %c0_i32 = arith.constant 0 : i32
    %c0_i32_0 = arith.constant 0 : i32
    return %arg0, %c0_i32 : i32, i32
  }
}

</mosaic_0001>

<llo_original>
// kernel: tpu_custom_call.1
$region0: #{tpu_custom_call.1}
  #allocation0 [shape = 'u32[]', space=smem, size = 0x4, offset = 0x4, fixed_abs, tag = 'smem constant byte address 0x4 - core index']
  #allocation1 [shape = 'u32[144,128]{1,0:T(1,128)}', space=vmem, size = 0x12000, scoped, tag = 'internal scratch']
  %s0 = inlined_call_operand.hbm [shape: f32[2,8,32], index: 0, kind: input, shape index: {}]
  %s1 = inlined_call_operand.hbm [shape: f32[2,32], index: 1, kind: output, shape index: {}]
  %s2 = sld [smem:[#allocation0]]
  $region18: #{tpu_custom_call.1} parent=0
    _
  %s4 = ssub.s32 1, %s2
  %s5 = scalar_select 0, %s4, %s2
  $region1: #{tpu_custom_call.1} parent=0
    #allocation2 [shape = 'u8[8192]{0}', space=vmem, size = 0x2000, scoped, tag = 'input window, operand 0, single buffered']
    #allocation3 [shape = 's32[1]{0}', space=sflag, size = 0x4, scoped, tag = 'scoped memory for tpu_custom_call.1']
    #allocation4 [shape = 's32[1]{0}', space=sflag, size = 0x4, scoped, tag = 'scoped memory for tpu_custom_call.1']
    #allocation5 [shape = 'u8[1024]{0}', space=vmem, size = 0x400, scoped, tag = 'output window, operand 0, single buffered']
    %6 = vsyncpa [#allocation3], 0
    %7 = vsyncpa [#allocation4], 0
    // Predicated region
    $region2: #{tpu_custom_call.1} parent=1 // pred_check
      _
    $region3: #{tpu_custom_call.1} parent=1 // pred_check_branch
      %9 = sbr.rel (0) target = $region5
    $region4: #{tpu_custom_call.1} parent=1 // pred_region
      %s11 = ssub.s32 256, 256
      %12 = vsyncadd [#allocation3], %s11
      %s13 = sshll.u32 [#allocation2], 4
      %s14 = int_to_ptr.vmem [resolvable:$true] %s13
      %19 = dma.hbm_to_vmem [thread:$0]  %s0, 256, %s14, [#allocation3], 128, 128, 8
    $region5: #{tpu_custom_call.1} parent=1 // pred_fallthru
      _
    // Predicated region
    $region6: #{tpu_custom_call.1} parent=1 // pred_check
      _
    $region7: #{tpu_custom_call.1} parent=1 // pred_check_branch
      %21 = sbr.rel (0) target = $region9
    $region8: #{tpu_custom_call.1} parent=1 // pred_region
      %22 = dma.done [#allocation3], 256
    $region9: #{tpu_custom_call.1} parent=1 // pred_fallthru
      _
    %v23 = vld [vmem:[#allocation2] sm:$0x1]
    %v24 = vld [vmem:[#allocation2 + $0x8] sm:$0x1]
    %v27 = vrot.slane %v24, 7
    %vm28 = vcmask 1041409
    %v29 = vsel %vm28, %v27, %v23
    %vm31 = vcmask 254976
    %32 = vst.msk [vmem:[#allocation5] sm:$0x3] %vm31, %v29
    // Predicated region
    $region10: #{tpu_custom_call.1} parent=1 // pred_check
      _
    $region11: #{tpu_custom_call.1} parent=1 // pred_check_branch
      %34 = sbr.rel (0) target = $region13
    $region12: #{tpu_custom_call.1} parent=1 // pred_region
      %s36 = ssub.s32 32, 32
      %37 = vsyncadd [#allocation4], %s36
      %s39 = sshll.u32 [#allocation5], 4
      %s40 = int_to_ptr.vmem [resolvable:$true] %s39
      %42 = dma.vmem_to_hbm [thread:$0]  %s40, 32, %s1, [#allocation4]
    $region13: #{tpu_custom_call.1} parent=1 // pred_fallthru
      _
    // Predicated region
    $region14: #{tpu_custom_call.1} parent=1 // pred_check
      _
    $region15: #{tpu_custom_call.1} parent=1 // pred_check_branch
      %44 = sbr.rel (0) target = $region17
    $region16: #{tpu_custom_call.1} parent=1 // pred_region
      %45 = dma.done [#allocation4], 32
    $region17: #{tpu_custom_call.1} parent=1 // pred_fallthru
      _
    %46 = vsyncpa [#allocation3], 1
    %47 = vsyncpa [#allocation4], 1

</llo_original>
